<compile_context>
chip_gen: v5e
topology: v5e:2x2
jax: 0.10.0
libtpu: 0.0.40
codegen_flags: <defaults>
</compile_context>

<pallas_src>
import jax
import jax.numpy as jnp
from jax.experimental import pallas as pl
from jax.experimental.pallas import tpu as pltpu


def channel_attention(x, w1, w2, *, hw_tile=1024, batch_tile=8,
                      vmem_block_budget=24 * 1024 * 1024):
    """x: (B, C, H, W) NCHW (any float dtype); w1: (C//r, C); w2: (C, C//r).

    Returns sigmoid(fc2(relu(fc1(avgpool(x)))) + fc2(relu(fc1(maxpool(x)))))
    with shape (B, C, 1, 1), matching the PyTorch module.
    """
    B, C, H, W = x.shape
    HW = H * W

    # Keep x in its native dtype (halves HBM bytes for bf16 inputs).
    x3 = x.reshape(B, C, HW)
    w1_t = jnp.asarray(w1, jnp.float32).T           # (C, Cr)
    w2_t = jnp.asarray(w2, jnp.float32).T           # (Cr, C)
    Cr = w1_t.shape[1]
    x_itemsize = jnp.dtype(x3.dtype).itemsize

    # ---- tile selection ---------------------------------------------------
    if HW <= hw_tile:
        hwt = HW                                     # full spatial extent
    else:
        assert hw_tile % 128 == 0, "hw_tile must be a multiple of 128"
        hwt = hw_tile
    # >= 2 batch tiles whenever B >= 2 so the "parallel" batch axis can split
    # across v7x's two TensorCores.
    bt = max(1, min(batch_tile, pl.cdiv(B, 2)))
    # Shrink tiles until the double-buffered input block fits the VMEM budget
    # (conservative for v7x's 64 MiB VMEM; v5e/v6e have plenty of headroom).
    while bt > 1 and 2 * bt * C * hwt * x_itemsize > vmem_block_budget:
        bt = max(1, bt // 2)
    while hwt > 128 and hwt % 256 == 0 and \
            2 * bt * C * hwt * x_itemsize > vmem_block_budget:
        hwt //= 2

    n_b = pl.cdiv(B, bt)
    n_hw = pl.cdiv(HW, hwt)
    need_mask = (HW % hwt) != 0
    inv_hw = 1.0 / float(HW)

    def kernel(x_ref, w1t_ref, w2t_ref, o_ref, sum_scr, max_scr):
        hw_idx = pl.program_id(1)
        last = n_hw - 1

        def partials(mask_boundary):
            x_blk = x_ref[...]                       # (bt, C, hwt), native dtype
            if mask_boundary:
                pos = jax.lax.broadcasted_iota(jnp.int32, x_blk.shape, 2) \
                    + hw_idx * hwt
                valid = pos < HW
                s_in = jnp.where(valid, x_blk, 0.0)
                m_in = jnp.where(valid, x_blk, -jnp.inf)
            else:
                s_in = x_blk
                m_in = x_blk
            # Lane reduction per tile -> tiny (bt, C) partials.  Sum accumulates
            # in f32; max stays in the native dtype until the final cast.
            ps = jnp.sum(s_in, axis=-1, dtype=jnp.float32)     # (bt, C)
            pm = jnp.max(m_in, axis=-1).astype(jnp.float32)    # (bt, C)
            return ps, pm

        def accumulate(mask_boundary):
            ps, pm = partials(mask_boundary)

            @pl.when(hw_idx == 0)
            def _():
                sum_scr[...] = ps
                max_scr[...] = pm

            @pl.when(hw_idx > 0)
            def _():
                sum_scr[...] = sum_scr[...] + ps
                max_scr[...] = jnp.maximum(max_scr[...], pm)

        if need_mask:
            # Only the (ragged) final spatial tile pays for iota/compare/select.
            @pl.when(hw_idx == last)
            def _():
                accumulate(True)

            @pl.when(hw_idx < last)
            def _():
                accumulate(False)
        else:
            accumulate(False)

        # Finalize: avg/max MLP (stacked -> single fc1/ReLU/fc2 pass) + sigmoid.
        @pl.when(hw_idx == last)
        def _():
            avg = sum_scr[...] * inv_hw                       # (bt, C)
            mx = max_scr[...]                                 # (bt, C)
            pooled = jnp.concatenate([avg, mx], axis=0)       # (2*bt, C)
            h = jnp.dot(pooled, w1t_ref[...],
                        preferred_element_type=jnp.float32)   # (2*bt, Cr)
            h = jnp.maximum(h, 0.0)
            y = jnp.dot(h, w2t_ref[...],
                        preferred_element_type=jnp.float32)   # (2*bt, C)
            o_ref[0] = jax.nn.sigmoid(y[:bt] + y[bt:]).astype(o_ref.dtype)

    # VMEM budget: double-buffered x block + weights + out block + tiny scratch.
    x_block_bytes = bt * C * hwt * x_itemsize
    w_bytes = (w1_t.size + w2_t.size) * 4
    out_block_bytes = bt * C * jnp.dtype(x.dtype).itemsize
    scratch_bytes = 2 * bt * C * 4
    vmem_needed = 2 * x_block_bytes + 2 * w_bytes + 2 * out_block_bytes + scratch_bytes
    # 32 MiB cap: inside v7x's default scoped limit (64 MiB physical), generous
    # for v5e/v6e.  Tile selection keeps vmem_needed comfortably below it.
    vmem_limit = int(min(max(2 * vmem_needed, 16 * 1024 * 1024), 32 * 1024 * 1024))

    cost = pl.CostEstimate(
        flops=int(2 * B * C * HW + 8 * B * C * Cr),
        transcendentals=int(B * C),
        bytes_accessed=int(x3.size * x_itemsize + w_bytes
                           + B * C * jnp.dtype(x.dtype).itemsize),
    )

    out = pl.pallas_call(
        kernel,
        out_shape=jax.ShapeDtypeStruct((n_b, bt, C), x.dtype),
        grid=(n_b, n_hw),
        in_specs=[
            # Note: if a profile shows exposed DMA at batch-tile boundaries,
            # add pipeline_mode=pl.Buffered(3) here (cheap now that scratch is tiny).
            pl.BlockSpec((bt, C, hwt), lambda b, h: (b, 0, h)),
            pl.BlockSpec((C, Cr), lambda b, h: (0, 0)),
            pl.BlockSpec((Cr, C), lambda b, h: (0, 0)),
        ],
        out_specs=pl.BlockSpec((1, bt, C), lambda b, h: (b, 0, 0)),
        scratch_shapes=[
            pltpu.VMEM((bt, C), jnp.float32),   # running sum (f32)
            pltpu.VMEM((bt, C), jnp.float32),   # running max (f32)
        ],
        compiler_params=pltpu.CompilerParams(
            dimension_semantics=("parallel", "arbitrary"),
            vmem_limit_bytes=vmem_limit,
        ),
        cost_estimate=cost,
    )(x3, w1_t, w2_t)

    # Drop padding rows from a ragged final batch tile and restore (B, C, 1, 1).
    return out.reshape(n_b * bt, C)[:B].reshape(B, C, 1, 1)


def channel_attention_ref(x, w1, w2):
    """Pure-JAX reference of the PyTorch forward."""
    xf = x.astype(jnp.float32)
    avg = jnp.mean(xf, axis=(2, 3))                 # (B, C)
    mx = jnp.max(xf, axis=(2, 3))                   # (B, C)

    def mlp(p):
        h = jnp.maximum(p @ w1.T, 0.0)              # (B, Cr)
        return h @ w2.T                             # (B, C)

    out = jax.nn.sigmoid(mlp(avg) + mlp(mx))
    return out[:, :, None, None].astype(x.dtype)


def _run_case(key, B, C, H, W, ratio, **kw):
    Cr = C // ratio
    kx, k1, k2 = jax.random.split(key, 3)
    x = jax.random.normal(kx, (B, C, H, W), dtype=jnp.float32)
    # Conv2d 1x1, no bias: fc1.weight (C//r, C); fc2.weight (C, C//r)
    w1 = jax.random.normal(k1, (Cr, C), dtype=jnp.float32) * (1.0 / jnp.sqrt(C))
    w2 = jax.random.normal(k2, (C, Cr), dtype=jnp.float32) * (1.0 / jnp.sqrt(Cr))

    out = jax.block_until_ready(channel_attention(x, w1, w2, **kw))
    ref = channel_attention_ref(x, w1, w2)
    assert out.shape == (B, C, 1, 1)
    assert jnp.allclose(out, ref, atol=1e-5, rtol=1e-5), "mismatch vs reference"


if __name__ == "__main__":
    key = jax.random.PRNGKey(0)
    k0, k1 = jax.random.split(key)

    # Single spatial tile; batch split into 2 grid tiles (bt=1, n_b=2) so both
    # v7x TensorCores would get work.
    _run_case(k0, B=2, C=64, H=16, W=16, ratio=16)

    # Multi-tile spatial reduction with a ragged boundary tile (HW=729, hwt=512)
    # and a ragged batch tile (B=3, bt=2) to exercise the masked-last-tile and
    # padding-row paths.
    _run_case(k1, B=3, C=32, H=27, W=27, ratio=16, hw_tile=512)

    print("KERNEL_OK")
</pallas_src>

<mosaic_0001>
module attributes {stable_mosaic.version = 11 : i64} {
  func.func @kernel(%arg0: i32, %arg1: i32, %arg2: memref<1x64x256xf32, #tpu.memory_space<vmem>>, %arg3: memref<64x4xf32, #tpu.memory_space<vmem>>, %arg4: memref<4x64xf32, #tpu.memory_space<vmem>>, %arg5: memref<1x1x64xf32, #tpu.memory_space<vmem>>, %arg6: memref<1x64xf32, #tpu.memory_space<vmem>>, %arg7: memref<1x64xf32, #tpu.memory_space<vmem>>) attributes {dimension_semantics = [#tpu.dimension_semantics<parallel>, #tpu.dimension_semantics<arbitrary>], iteration_bounds = array<i64: 2, 1>, scalar_prefetch = 0 : i64, scratch_operands = 2 : i64, tpu.core_type = #tpu.core_type<tc>, window_params = [{transform_indices = @transform_0, window_bounds = array<i64: 1, 64, 256>}, {pipeline_mode = #tpu.pipeline_mode<synchronous>, transform_indices = @transform_1, window_bounds = array<i64: 64, 4>}, {pipeline_mode = #tpu.pipeline_mode<synchronous>, transform_indices = @transform_2, window_bounds = array<i64: 4, 64>}, {transform_indices = @transform_3, window_bounds = array<i64: 1, 1, 64>}]} {
    %c0 = arith.constant 0 : index
    %c0_0 = arith.constant 0 : index
    %c0_1 = arith.constant 0 : index
    %0 = vector.load %arg2[%c0, %c0_0, %c0_1] : memref<1x64x256xf32, #tpu.memory_space<vmem>>, vector<1x64x256xf32>
    %cst = arith.constant dense<0.000000e+00> : vector<1x64xf32>
    %1 = vector.multi_reduction <add>, %0, %cst [2] : vector<1x64x256xf32> to vector<1x64xf32>
    %cst_2 = arith.constant dense<0xFF800000> : vector<1x64xf32>
    %2 = vector.multi_reduction <maximumf>, %0, %cst_2 [2] : vector<1x64x256xf32> to vector<1x64xf32>
    %c0_i32 = arith.constant 0 : i32
    %3 = arith.cmpi eq, %arg1, %c0_i32 : i32
    %4 = arith.extui %3 : i1 to i32
    %c0_i32_3 = arith.constant 0 : i32
    %5 = arith.cmpi ne, %4, %c0_i32_3 : i32
    scf.if %5 {
      %c0_8 = arith.constant 0 : index
      %c0_9 = arith.constant 0 : index
      %12 = vector.load %arg6[%c0_8, %c0_9] : memref<1x64xf32, #tpu.memory_space<vmem>>, vector<1x64xf32>
      tpu.vector_store %arg6[%c0_8, %c0_9], %1 {strides = array<i32>} : memref<1x64xf32, #tpu.memory_space<vmem>>, vector<1x64xf32>,
      %c0_10 = arith.constant 0 : index
      %c0_11 = arith.constant 0 : index
      %13 = vector.load %arg7[%c0_10, %c0_11] : memref<1x64xf32, #tpu.memory_space<vmem>>, vector<1x64xf32>
      tpu.vector_store %arg7[%c0_10, %c0_11], %2 {strides = array<i32>} : memref<1x64xf32, #tpu.memory_space<vmem>>, vector<1x64xf32>,
    } else {
    }
    %c0_i32_4 = arith.constant 0 : i32
    %6 = arith.cmpi sgt, %arg1, %c0_i32_4 : i32
    %7 = arith.extui %6 : i1 to i32
    %c0_i32_5 = arith.constant 0 : i32
    %8 = arith.cmpi ne, %7, %c0_i32_5 : i32
    scf.if %8 {
      %c0_8 = arith.constant 0 : index
      %c0_9 = arith.constant 0 : index
      %12 = vector.load %arg6[%c0_8, %c0_9] : memref<1x64xf32, #tpu.memory_space<vmem>>, vector<1x64xf32>
      %13 = arith.addf %12, %1 : vector<1x64xf32>
      %c0_10 = arith.constant 0 : index
      %c0_11 = arith.constant 0 : index
      %14 = vector.load %arg6[%c0_10, %c0_11] : memref<1x64xf32, #tpu.memory_space<vmem>>, vector<1x64xf32>
      tpu.vector_store %arg6[%c0_10, %c0_11], %13 {strides = array<i32>} : memref<1x64xf32, #tpu.memory_space<vmem>>, vector<1x64xf32>,
      %c0_12 = arith.constant 0 : index
      %c0_13 = arith.constant 0 : index
      %15 = vector.load %arg7[%c0_12, %c0_13] : memref<1x64xf32, #tpu.memory_space<vmem>>, vector<1x64xf32>
      %16 = arith.maximumf %15, %2 : vector<1x64xf32>
      %c0_14 = arith.constant 0 : index
      %c0_15 = arith.constant 0 : index
      %17 = vector.load %arg7[%c0_14, %c0_15] : memref<1x64xf32, #tpu.memory_space<vmem>>, vector<1x64xf32>
      tpu.vector_store %arg7[%c0_14, %c0_15], %16 {strides = array<i32>} : memref<1x64xf32, #tpu.memory_space<vmem>>, vector<1x64xf32>,
    } else {
    }
    %c0_i32_6 = arith.constant 0 : i32
    %9 = arith.cmpi eq, %arg1, %c0_i32_6 : i32
    %10 = arith.extui %9 : i1 to i32
    %c0_i32_7 = arith.constant 0 : i32
    %11 = arith.cmpi ne, %10, %c0_i32_7 : i32
    scf.if %11 {
      %c0_8 = arith.constant 0 : index
      %c0_9 = arith.constant 0 : index
      %12 = vector.load %arg6[%c0_8, %c0_9] : memref<1x64xf32, #tpu.memory_space<vmem>>, vector<1x64xf32>
      %cst_10 = arith.constant 3.906250e-03 : f32
      %13 = vector.broadcast %cst_10 : f32 to vector<1x64xf32>
      %14 = arith.mulf %12, %13 : vector<1x64xf32>
      %c0_11 = arith.constant 0 : index
      %c0_12 = arith.constant 0 : index
      %15 = vector.load %arg7[%c0_11, %c0_12] : memref<1x64xf32, #tpu.memory_space<vmem>>, vector<1x64xf32>
      %16 = tpu.concatenate %14, %15 in 0 : vector<1x64xf32>, vector<1x64xf32> -> vector<2x64xf32>
      %c0_13 = arith.constant 0 : index
      %c0_14 = arith.constant 0 : index
      %17 = vector.load %arg3[%c0_13, %c0_14] : memref<64x4xf32, #tpu.memory_space<vmem>>, vector<64x4xf32>
      %cst_15 = arith.constant dense<0.000000e+00> : vector<2x4xf32>
      %18 = tpu.matmul %16, %17, %cst_15 {dimension_numbers = #tpu.dot_dimension_numbers<[1], [0], [0], [1], [0, 0, 1, 1], [], []>} : vector<2x64xf32>, vector<64x4xf32>, vector<2x4xf32> -> vector<2x4xf32>
      %cst_16 = arith.constant 0.000000e+00 : f32
      %19 = vector.broadcast %cst_16 : f32 to vector<2x4xf32>
      %20 = arith.maximumf %18, %19 : vector<2x4xf32>
      %c0_17 = arith.constant 0 : index
      %c0_18 = arith.constant 0 : index
      %21 = vector.load %arg4[%c0_17, %c0_18] : memref<4x64xf32, #tpu.memory_space<vmem>>, vector<4x64xf32>
      %cst_19 = arith.constant dense<0.000000e+00> : vector<2x64xf32>
      %22 = tpu.matmul %20, %21, %cst_19 {dimension_numbers = #tpu.dot_dimension_numbers<[1], [0], [0], [1], [0, 0, 1, 1], [], []>} : vector<2x4xf32>, vector<4x64xf32>, vector<2x64xf32> -> vector<2x64xf32>
      %23 = vector.extract_strided_slice %22 {offsets = [0, 0], sizes = [1, 64], strides = [1, 1]} : vector<2x64xf32> to vector<1x64xf32>
      %24 = vector.extract_strided_slice %22 {offsets = [1, 0], sizes = [1, 64], strides = [1, 1]} : vector<2x64xf32> to vector<1x64xf32>
      %25 = arith.addf %23, %24 : vector<1x64xf32>
      %26 = arith.negf %25 : vector<1x64xf32>
      %27 = math.exp %26 : vector<1x64xf32>
      %cst_20 = arith.constant 1.000000e+00 : f32
      %28 = vector.broadcast %cst_20 : f32 to vector<1x64xf32>
      %29 = arith.addf %28, %27 : vector<1x64xf32>
      %30 = arith.divf %28, %29 : vector<1x64xf32>
      %c0_21 = arith.constant 0 : index
      %c0_22 = arith.constant 0 : index
      %c0_23 = arith.constant 0 : index
      %31 = vector.load %arg5[%c0_21, %c0_22, %c0_23] : memref<1x1x64xf32, #tpu.memory_space<vmem>>, vector<1x1x64xf32>
      %32 = vector.shape_cast %31 : vector<1x1x64xf32> to vector<1x64xf32>
      %33 = vector.shape_cast %30 : vector<1x64xf32> to vector<1x1x64xf32>
      tpu.vector_store %arg5[%c0_21, %c0_22, %c0_23], %33 {strides = array<i32>} : memref<1x1x64xf32, #tpu.memory_space<vmem>>, vector<1x1x64xf32>,
    } else {
    }
    return
  }
  func.func @transform_0(%arg0: i32, %arg1: i32) -> (i32, i32, i32) {
    %c0_i32 = arith.constant 0 : i32
    %c0_i32_0 = arith.constant 0 : i32
    return %arg0, %c0_i32, %arg1 : i32, i32, i32
  }
  func.func @transform_1(%arg0: i32, %arg1: i32) -> (i32, i32) {
    %c0_i32 = arith.constant 0 : i32
    %c0_i32_0 = arith.constant 0 : i32
    %c0_i32_1 = arith.constant 0 : i32
    return %c0_i32, %c0_i32_0 : i32, i32
  }
  func.func @transform_2(%arg0: i32, %arg1: i32) -> (i32, i32) {
    %c0_i32 = arith.constant 0 : i32
    %c0_i32_0 = arith.constant 0 : i32
    %c0_i32_1 = arith.constant 0 : i32
    return %c0_i32, %c0_i32_0 : i32, i32
  }
  func.func @transform_3(%arg0: i32, %arg1: i32) -> (i32, i32, i32) {
    %c0_i32 = arith.constant 0 : i32
    %c0_i32_0 = arith.constant 0 : i32
    %c0_i32_1 = arith.constant 0 : i32
    return %arg0, %c0_i32, %c0_i32_0 : i32, i32, i32
  }
}

</mosaic_0001>

<llo_original>
// kernel: tpu_custom_call.1
$region0: #{tpu_custom_call.1}
  #allocation0 [shape = 'u32[]', space=smem, size = 0x4, offset = 0x4, fixed_abs, tag = 'smem constant byte address 0x4 - core index']
  #allocation1 [shape = 'u32[72,128]{1,0:T(1,128)}', space=vmem, size = 0x9000, scoped, tag = 'internal scratch']
  #allocation2 [shape = 'f32[1,64]{1,0:T(1,128)}', space=vmem, size = 0x200, scoped, tag = 'scratch operand']
  #allocation3 [shape = 'f32[1,64]{1,0:T(1,128)}', space=vmem, size = 0x200, scoped, tag = 'scratch operand']
  %s0 = inlined_call_operand.hbm [shape: f32[2,64,256], index: 0, kind: input, shape index: {}]
  %s1 = inlined_call_operand.vmem [shape: f32[64,4], index: 1, kind: input, shape index: {}]
  %s2 = inlined_call_operand.vmem [shape: f32[4,64], index: 2, kind: input, shape index: {}]
  %s3 = inlined_call_operand.hbm [shape: f32[2,1,64], index: 3, kind: output, shape index: {}]
  %s4 = sld [smem:[#allocation0]]
  $region61: #{tpu_custom_call.1} parent=0
    _
  %s6 = ssub.s32 1, %s4
  %s7 = scalar_select 0, %s6, %s4
  $region1: #{tpu_custom_call.1} parent=0
    #allocation4 [shape = 'u8[131072]{0}', space=vmem, size = 0x20000, scoped, tag = 'input window, operand 0']
    #allocation5 [shape = 's32[2]{0}', space=sflag, size = 0x8, scoped, tag = 'scoped memory for tpu_custom_call.1']
    #allocation6 [shape = 's32[2]{0}', space=sflag, size = 0x8, scoped, tag = 'scoped memory for tpu_custom_call.1']
    #allocation7 [shape = 'u8[1024]{0}', space=vmem, size = 0x400, scoped, tag = 'output window, operand 0']
    %8 = vsyncpa [#allocation5], 0
    %s9 = scalar_lea.sflag [#allocation5], 1
    %10 = vsyncpa %s9, 0
    %11 = vsyncpa [#allocation6], 0
    %s12 = scalar_lea.sflag [#allocation6], 1
    %13 = vsyncpa %s12, 0
    loop: start=0, step=1, limit=4
    $region2: #{tpu_custom_call.1} parent=1 // loop_pre_header
      _
    $region3: #{tpu_custom_call.1} parent=1 // loop_header
      %s15 = sphi 0, %s19
      %p16 = scmp.ge.s32.totalorder %s15, 4
      %s22 = sphi 0, %s34
      %s23 = sphi 0, %s30
      %s24 = sphi 0, %s22
      %s25 = sphi 0, %s23
      %s26 = sphi 0, %s24
      %s27 = sphi 0, %s25
      %s39 = sphi 0, %s41
      %s42 = sphi 0, %s39
      %s43 = sphi 0, %s42
      %s59 = sphi 0, %s43
      %s63 = sphi 0, %s63
      %s65 = sphi 0, %s63
      %s66 = sphi 0, %s65
      %s80 = sphi 0, %s66
      %s84 = sphi 0, %s84
      %s86 = sphi 0, %s84
      %s87 = sphi 0, %s86
      %s101 = sphi 0, %s87
      %s107 = sphi 0, %s109
      %s110 = sphi 0, %s107
      %s111 = sphi 0, %s110
      %s127 = sphi 0, %s111
    $region4: #{tpu_custom_call.1} parent=1 // loop_header_branch
      %18 = sbr.rel (%p16) target = $region8
    $region5: #{tpu_custom_call.1} parent=1 // loop_body
      %s20 = ssub.s32 %s15, 1
      %s21 = ssub.s32 %s15, 2
      %s28 = sadd.s32 1, %s23
      %p29 = scmp.ge.s32.totalorder %s28, 1
      %s30 = scalar_select %p29, 0, %s28
      %s31 = sadd.s32 1, %s22
      %s32 = scalar_select %p29, %s31, %s22
      %p33 = scmp.ge.s32.totalorder %s32, 2
      %s34 = scalar_select %p33, 0, %s32
      %s35 = ssub.s32 %s22, %s34
      %s36 = ssub.s32 %s23, %s30
      %s37 = sor.u32 %s35, %s36
      %p38 = scmp.eq.s32.totalorder %s37, 0
      %s40 = sadd.s32 %s39, 1
      %s41 = scalar_select %p38, %s39, %s40
      %p44 = pneg %p38
      %p45 = scmp.eq.s32.totalorder %s15, 1
      %p46 = por %p44, %p45
      %p47 = scmp.ne.s32.totalorder %s39, %s42
      %p48 = scmp.eq.s32.totalorder %s15, 0
      %p49 = por %p47, %p48
      %p50 = scmp.ne.s32.totalorder %s39, %s42
      %p51 = scmp.eq.s32.totalorder %s20, 1
      %p52 = por %p50, %p51
      %p53 = scmp.ne.s32.totalorder %s42, %s43
      %p54 = scmp.eq.s32.totalorder %s20, 0
      %p55 = por %p53, %p54
      %p56 = scmp.ne.s32.totalorder %s42, %s43
      %p57 = scmp.eq.s32.totalorder %s21, 1
      %p58 = por %p56, %p57
      %p60 = scmp.ne.s32.totalorder %s43, %s59
      %p61 = scmp.eq.s32.totalorder %s21, 0
      %p62 = por %p60, %p61
      %s64 = sadd.s32 %s63, 1
      %p67 = scmp.eq.s32.totalorder %s15, 1
      %p68 = scmp.ne.s32.totalorder %s63, %s65
      %p69 = scmp.eq.s32.totalorder %s15, 0
      %p70 = por %p68, %p69
      %p71 = scmp.ne.s32.totalorder %s63, %s65
      %p72 = scmp.eq.s32.totalorder %s20, 1
      %p73 = por %p71, %p72
      %p74 = scmp.ne.s32.totalorder %s65, %s66
      %p75 = scmp.eq.s32.totalorder %s20, 0
      %p76 = por %p74, %p75
      %p77 = scmp.ne.s32.totalorder %s65, %s66
      %p78 = scmp.eq.s32.totalorder %s21, 1
      %p79 = por %p77, %p78
      %p81 = scmp.ne.s32.totalorder %s66, %s80
      %p82 = scmp.eq.s32.totalorder %s21, 0
      %p83 = por %p81, %p82
      %s85 = sadd.s32 %s84, 1
      %p88 = scmp.eq.s32.totalorder %s15, 1
      %p89 = scmp.ne.s32.totalorder %s84, %s86
      %p90 = scmp.eq.s32.totalorder %s15, 0
      %p91 = por %p89, %p90
      %p92 = scmp.ne.s32.totalorder %s84, %s86
      %p93 = scmp.eq.s32.totalorder %s20, 1
      %p94 = por %p92, %p93
      %p95 = scmp.ne.s32.totalorder %s86, %s87
      %p96 = scmp.eq.s32.totalorder %s20, 0
      %p97 = por %p95, %p96
      %p98 = scmp.ne.s32.totalorder %s86, %s87
      %p99 = scmp.eq.s32.totalorder %s21, 1
      %p100 = por %p98, %p99
      %p102 = scmp.ne.s32.totalorder %s87, %s101
      %p103 = scmp.eq.s32.totalorder %s21, 0
      %p104 = por %p102, %p103
      %s105 = ssub.s32 %s22, %s34
      %p106 = scmp.eq.s32.totalorder %s105, 0
      %s108 = sadd.s32 %s107, 1
      %s109 = scalar_select %p106, %s107, %s108
      %p112 = pneg %p106
      %p113 = scmp.eq.s32.totalorder %s15, 1
      %p114 = por %p112, %p113
      %p115 = scmp.ne.s32.totalorder %s107, %s110
      %p116 = scmp.eq.s32.totalorder %s15, 0
      %p117 = por %p115, %p116
      %p118 = scmp.ne.s32.totalorder %s107, %s110
      %p119 = scmp.eq.s32.totalorder %s20, 1
      %p120 = por %p118, %p119
      %p121 = scmp.ne.s32.totalorder %s110, %s111
      %p122 = scmp.eq.s32.totalorder %s20, 0
      %p123 = por %p121, %p122
      %p124 = scmp.ne.s32.totalorder %s110, %s111
      %p125 = scmp.eq.s32.totalorder %s21, 1
      %p126 = por %p124, %p125
      %p128 = scmp.ne.s32.totalorder %s111, %s127
      %p129 = scmp.eq.s32.totalorder %s21, 0
      %p130 = por %p128, %p129
      %p131 = scmp.le.s32.totalorder 1, %s15
      %p132 = scmp.lt.s32.totalorder %s15, 3
      %p133 = pnand %p131, %p132
      %p134 = pneg %p133
      // Predicated region
      $region9: #{tpu_custom_call.1} parent=5 // pred_check
        _
      $region10: #{tpu_custom_call.1} parent=5 // pred_check_branch
        %136 = sbr.rel (%p133) target = $region12
      $region11: #{tpu_custom_call.1} parent=5 // pred_region
        %s137 = ssub.s32 %s15, 1
        // Predicated region
        $region13: #{tpu_custom_call.1} parent=11 // pred_check
          %p138 = pneg %p76
        $region14: #{tpu_custom_call.1} parent=11 // pred_check_branch
          %140 = sbr.rel (%p138) target = $region16
        $region15: #{tpu_custom_call.1} parent=11 // pred_region
          _
        $region16: #{tpu_custom_call.1} parent=11 // pred_fallthru
          _
        // Predicated region
        $region17: #{tpu_custom_call.1} parent=11 // pred_check
          %p141 = pneg %p97
        $region18: #{tpu_custom_call.1} parent=11 // pred_check_branch
          %143 = sbr.rel (%p141) target = $region20
        $region19: #{tpu_custom_call.1} parent=11 // pred_region
          _
        $region20: #{tpu_custom_call.1} parent=11 // pred_fallthru
          _
      $region12: #{tpu_custom_call.1} parent=5 // pred_fallthru
        _
      %p144 = scmp.lt.s32.totalorder %s15, 2
      // Predicated region
      $region21: #{tpu_custom_call.1} parent=5 // pred_check
        %p145 = pneg %p144
      $region22: #{tpu_custom_call.1} parent=5 // pred_check_branch
        %147 = sbr.rel (%p145) target = $region24
      $region23: #{tpu_custom_call.1} parent=5 // pred_region
        // Predicated region
        $region25: #{tpu_custom_call.1} parent=23 // pred_check
          %p148 = pneg %p49
        $region26: #{tpu_custom_call.1} parent=23 // pred_check_branch
          %150 = sbr.rel (%p148) target = $region28
        $region27: #{tpu_custom_call.1} parent=23 // pred_region
          %s151 = sand.u32 %s39, 1
          %s152 = scalar_lea.sflag [#allocation5], %s151
          %s153 = sand.u32 %s39, 1
          %s154 = smul.addr %s153, 128
          %s155 = scalar_lea.vmem [#allocation4], %s154
          %s156 = smul.u32 2, %s23
          %158 = vsyncadd %s152, 0
          %s159 = smul.addr %s22, 16
          %s160 = sadd.s32 %s156, %s159
          %s161 = smul.addr %s160, 8
          %s162 = scalar_lea.hbm %s0, %s161
          %s163 = sshll.u32 %s162, 4
          %s164 = int_to_ptr.hbm [resolvable:$true] %s163
          %s165 = sshll.u32 %s155, 4
          %s166 = int_to_ptr.vmem [resolvable:$true] %s165
          %171 = dma.hbm_to_vmem [thread:$0]  %s164, 2048, %s166, %s152, 256, 256, 16
        $region28: #{tpu_custom_call.1} parent=23 // pred_fallthru
          _
      $region24: #{tpu_custom_call.1} parent=5 // pred_fallthru
        _
      %p172 = scmp.le.s32.totalorder 1, %s15
      %p173 = scmp.lt.s32.totalorder %s15, 3
      %p174 = pnand %p172, %p173
      %p175 = pneg %p174
      // Predicated region
      $region29: #{tpu_custom_call.1} parent=5 // pred_check
        _
      $region30: #{tpu_custom_call.1} parent=5 // pred_check_branch
        %177 = sbr.rel (%p174) target = $region32
      $region31: #{tpu_custom_call.1} parent=5 // pred_region
        %s178 = ssub.s32 %s15, 1
        %s179 = sand.u32 %s42, 1
        %s180 = scalar_lea.sflag [#allocation5], %s179
        %s181 = sand.u32 %s42, 1
        %s182 = smul.addr %s181, 128
        %s183 = scalar_lea.vmem [#allocation4], %s182
        // Predicated region
        $region33: #{tpu_custom_call.1} parent=31 // pred_check
          %p184 = pneg %p55
        $region34: #{tpu_custom_call.1} parent=31 // pred_check_branch
          %186 = sbr.rel (%p184) target = $region36
        $region35: #{tpu_custom_call.1} parent=31 // pred_region
          %188 = dma.done %s180, 2048
        $region36: #{tpu_custom_call.1} parent=31 // pred_fallthru
          _
        %s189 = sand.u32 %s42, 1
        %s190 = scalar_lea.sflag [#allocation5], %s189
        %s191 = sand.u32 %s42, 1
        %s192 = smul.addr %s191, 128
        %s193 = scalar_lea.vmem [#allocation4], %s192
        %p194 = pneg %p55
        %p195 = pneg %p52
        %p196 = pneg %p76
        %p197 = pneg %p73
        %p198 = pneg %p97
        %p199 = pneg %p94
        %p200 = pneg %p123
        %p201 = pneg %p120
        %s202 = sand.u32 %s110, 1
        %s203 = scalar_lea.sflag [#allocation6], %s202
        %s204 = sand.u32 %s110, 1
        %s205 = scalar_lea.vmem [#allocation7], %s204
        %s206 = smul.u32 2, %s25
        %v207 = vld [vmem:[%s183] sm:$0xff]
        %v208 = vld [vmem:[%s183 + $0x8] sm:$0xff]
        %v209 = vld [vmem:[%s183 + $0x10] sm:$0xff]
        %v210 = vld [vmem:[%s183 + $0x18] sm:$0xff]
        %v211 = vld [vmem:[%s183 + $0x20] sm:$0xff]
        %v212 = vld [vmem:[%s183 + $0x28] sm:$0xff]
        %v213 = vld [vmem:[%s183 + $0x30] sm:$0xff]
        %v214 = vld [vmem:[%s183 + $0x38] sm:$0xff]
        %v215 = vld [vmem:[%s183 + $0x40] sm:$0xff]
        %v216 = vld [vmem:[%s183 + $0x48] sm:$0xff]
        %v217 = vld [vmem:[%s183 + $0x50] sm:$0xff]
        %v218 = vld [vmem:[%s183 + $0x58] sm:$0xff]
        %v219 = vld [vmem:[%s183 + $0x60] sm:$0xff]
        %v220 = vld [vmem:[%s183 + $0x68] sm:$0xff]
        %v221 = vld [vmem:[%s183 + $0x70] sm:$0xff]
        %v222 = vld [vmem:[%s183 + $0x78] sm:$0xff]
        %v223 = vadd.f32 %v207, %v208
        %224 = vadd.xlane.f32.xlu0 %v223
        %v225 = vpop.xlane.xlu0 %224
        %v226 = vadd.f32 %v209, %v210
        %227 = vadd.xlane.f32.xlu0 %v226
        %v228 = vpop.xlane.xlu0 %227
        %v229 = vadd.f32 %v211, %v212
        %230 = vadd.xlane.f32.xlu0 %v229
        %v231 = vpop.xlane.xlu0 %230
        %v232 = vadd.f32 %v213, %v214
        %233 = vadd.xlane.f32.xlu0 %v232
        %v234 = vpop.xlane.xlu0 %233
        %v235 = vadd.f32 %v215, %v216
        %236 = vadd.xlane.f32.xlu0 %v235
        %v237 = vpop.xlane.xlu0 %236
        %v238 = vadd.f32 %v217, %v218
        %239 = vadd.xlane.f32.xlu0 %v238
        %v240 = vpop.xlane.xlu0 %239
        %v241 = vadd.f32 %v219, %v220
        %242 = vadd.xlane.f32.xlu0 %v241
        %v243 = vpop.xlane.xlu0 %242
        %v244 = vadd.f32 %v221, %v222
        %245 = vadd.xlane.f32.xlu0 %v244
        %v246 = vpop.xlane.xlu0 %245
        %v247 = vmax.f32 %v207, %v208
        %248 = vmax.xlane.f32.xlu0 %v247
        %v249 = vpop.xlane.xlu0 %248
        %v250 = vmax.f32 %v209, %v210
        %251 = vmax.xlane.f32.xlu0 %v250
        %v252 = vpop.xlane.xlu0 %251
        %v253 = vmax.f32 %v211, %v212
        %254 = vmax.xlane.f32.xlu0 %v253
        %v255 = vpop.xlane.xlu0 %254
        %v256 = vmax.f32 %v213, %v214
        %257 = vmax.xlane.f32.xlu0 %v256
        %v258 = vpop.xlane.xlu0 %257
        %v259 = vmax.f32 %v215, %v216
        %260 = vmax.xlane.f32.xlu0 %v259
        %v261 = vpop.xlane.xlu0 %260
        %v262 = vmax.f32 %v217, %v218
        %263 = vmax.xlane.f32.xlu0 %v262
        %v264 = vpop.xlane.xlu0 %263
        %v265 = vmax.f32 %v219, %v220
        %266 = vmax.xlane.f32.xlu0 %v265
        %v267 = vpop.xlane.xlu0 %266
        %v268 = vmax.f32 %v221, %v222
        %269 = vmax.xlane.f32.xlu0 %v268
        %v270 = vpop.xlane.xlu0 %269
        %p271 = scmp.eq.s32.totalorder %s25, 0
        // Predicated region
        $region37: #{tpu_custom_call.1} parent=31 // pred_check
          %p272 = pneg %p271
        $region38: #{tpu_custom_call.1} parent=31 // pred_check_branch
          %274 = sbr.rel (%p272) target = $region40
        $region39: #{tpu_custom_call.1} parent=31 // pred_region
          %v283 = vlaneseq
          %v284 = vand.u32 %v283, 127
          %v285 = vperm.slane %v225, %v284
          %v286 = vadd.s32 %v284, 4294967288
          %v287 = vperm.slane %v228, %v286
          %vm288 = vcmask 130112
          %v289 = vsel %vm288, %v287, %v285
          %v290 = vadd.s32 %v284, 4294967280
          %v291 = vperm.slane %v231, %v290
          %vm292 = vcmask 195712
          %v293 = vsel %vm292, %v291, %v289
          %v294 = vadd.s32 %v284, 4294967272
          %v295 = vperm.slane %v234, %v294
          %vm296 = vcmask 261312
          %v297 = vsel %vm296, %v295, %v293
          %v298 = vadd.s32 %v284, 4294967264
          %v299 = vperm.slane %v237, %v298
          %vm300 = vcmask 326912
          %v301 = vsel %vm300, %v299, %v297
          %v302 = vadd.s32 %v284, 4294967256
          %v303 = vperm.slane %v240, %v302
          %vm304 = vcmask 392512
          %v305 = vsel %vm304, %v303, %v301
          %v306 = vadd.s32 %v284, 4294967248
          %v307 = vperm.slane %v243, %v306
          %vm308 = vcmask 458112
          %v309 = vsel %vm308, %v307, %v305
          %v310 = vadd.s32 %v284, 4294967240
          %v311 = vperm.slane %v246, %v310
          %vm312 = vcmask 523712
          %v313 = vsel %vm312, %v311, %v309
          %vm315 = vcmask 516096
          %316 = vst.msk [vmem:[#allocation2] sm:$0x1] %vm315, %v313
          %v325 = vperm.slane %v249, %v284
          %v326 = vperm.slane %v252, %v286
          %v327 = vsel %vm288, %v326, %v325
          %v328 = vperm.slane %v255, %v290
          %v329 = vsel %vm292, %v328, %v327
          %v330 = vperm.slane %v258, %v294
          %v331 = vsel %vm296, %v330, %v329
          %v332 = vperm.slane %v261, %v298
          %v333 = vsel %vm300, %v332, %v331
          %v334 = vperm.slane %v264, %v302
          %v335 = vsel %vm304, %v334, %v333
          %v336 = vperm.slane %v267, %v306
          %v337 = vsel %vm308, %v336, %v335
          %v338 = vperm.slane %v270, %v310
          %v339 = vsel %vm312, %v338, %v337
          %341 = vst.msk [vmem:[#allocation3] sm:$0x1] %vm315, %v339
        $region40: #{tpu_custom_call.1} parent=31 // pred_fallthru
          _
        %p342 = scmp.gt.s32.totalorder %s25, 0
        // Predicated region
        $region41: #{tpu_custom_call.1} parent=31 // pred_check
          %p343 = pneg %p342
        $region42: #{tpu_custom_call.1} parent=31 // pred_check_branch
          %345 = sbr.rel (%p343) target = $region44
        $region43: #{tpu_custom_call.1} parent=31 // pred_region
          %v346 = vld [vmem:[#allocation2] sm:$0x1]
          %v355 = vperm.slane %v225, 0
          %v356 = vperm.slane %v225, 1
          %v357 = vperm.slane %v225, 2
          %v358 = vperm.slane %v225, 3
          %v359 = vperm.slane %v225, 4
          %v360 = vperm.slane %v225, 5
          %v361 = vperm.slane %v225, 6
          %v362 = vperm.slane %v225, 7
          %v363 = vperm.slane %v228, 0
          %v364 = vperm.slane %v228, 1
          %v365 = vperm.slane %v228, 2
          %v366 = vperm.slane %v228, 3
          %v367 = vperm.slane %v228, 4
          %v368 = vperm.slane %v228, 5
          %v369 = vperm.slane %v228, 6
          %v370 = vperm.slane %v228, 7
          %v371 = vperm.slane %v231, 0
          %v372 = vperm.slane %v231, 1
          %v373 = vperm.slane %v231, 2
          %v374 = vperm.slane %v231, 3
          %v375 = vperm.slane %v231, 4
          %v376 = vperm.slane %v231, 5
          %v377 = vperm.slane %v231, 6
          %v378 = vperm.slane %v231, 7
          %v379 = vperm.slane %v234, 0
          %v380 = vperm.slane %v234, 1
          %v381 = vperm.slane %v234, 2
          %v382 = vperm.slane %v234, 3
          %v383 = vperm.slane %v234, 4
          %v384 = vperm.slane %v234, 5
          %v385 = vperm.slane %v234, 6
          %v386 = vperm.slane %v234, 7
          %v387 = vperm.slane %v237, 0
          %v388 = vperm.slane %v237, 1
          %v389 = vperm.slane %v237, 2
          %v390 = vperm.slane %v237, 3
          %v391 = vperm.slane %v237, 4
          %v392 = vperm.slane %v237, 5
          %v393 = vperm.slane %v237, 6
          %v394 = vperm.slane %v237, 7
          %v395 = vperm.slane %v240, 0
          %v396 = vperm.slane %v240, 1
          %v397 = vperm.slane %v240, 2
          %v398 = vperm.slane %v240, 3
          %v399 = vperm.slane %v240, 4
          %v400 = vperm.slane %v240, 5
          %v401 = vperm.slane %v240, 6
          %v402 = vperm.slane %v240, 7
          %v403 = vperm.slane %v243, 0
          %v404 = vperm.slane %v243, 1
          %v405 = vperm.slane %v243, 2
          %v406 = vperm.slane %v243, 3
          %v407 = vperm.slane %v243, 4
          %v408 = vperm.slane %v243, 5
          %v409 = vperm.slane %v243, 6
          %v410 = vperm.slane %v243, 7
          %v411 = vperm.slane %v246, 0
          %v412 = vperm.slane %v246, 1
          %v413 = vperm.slane %v246, 2
          %v414 = vperm.slane %v246, 3
          %v415 = vperm.slane %v246, 4
          %v416 = vperm.slane %v246, 5
          %v417 = vperm.slane %v246, 6
          %v418 = vperm.slane %v246, 7
          %419 = vst [vmem:[#allocation1] ss:$9 sm:$0xff] %v355
          %s420 = scalar_lea.vmem [#allocation1], 1
          %421 = vst [vmem:[%s420] ss:$9 sm:$0xff] %v356
          %s422 = scalar_lea.vmem [#allocation1], 2
          %423 = vst [vmem:[%s422] ss:$9 sm:$0xff] %v357
          %s424 = scalar_lea.vmem [#allocation1], 3
          %425 = vst [vmem:[%s424] ss:$9 sm:$0xff] %v358
          %s426 = scalar_lea.vmem [#allocation1], 4
          %427 = vst [vmem:[%s426] ss:$9 sm:$0xff] %v359
          %s428 = scalar_lea.vmem [#allocation1], 5
          %429 = vst [vmem:[%s428] ss:$9 sm:$0xff] %v360
          %s430 = scalar_lea.vmem [#allocation1], 6
          %431 = vst [vmem:[%s430] ss:$9 sm:$0xff] %v361
          %s432 = scalar_lea.vmem [#allocation1], 7
          %433 = vst [vmem:[%s432] ss:$9 sm:$0xff] %v362
          %v434 = vld [vmem:[#allocation1] sm:$0xff]
          %435 = vst [vmem:[#allocation1] ss:$9 sm:$0xff] %v363
          %436 = vst [vmem:[%s420] ss:$9 sm:$0xff] %v364
          %437 = vst [vmem:[%s422] ss:$9 sm:$0xff] %v365
          %438 = vst [vmem:[%s424] ss:$9 sm:$0xff] %v366
          %439 = vst [vmem:[%s426] ss:$9 sm:$0xff] %v367
          %440 = vst [vmem:[%s428] ss:$9 sm:$0xff] %v368
          %441 = vst [vmem:[%s430] ss:$9 sm:$0xff] %v369
          %442 = vst [vmem:[%s432] ss:$9 sm:$0xff] %v370
          %v443 = vld [vmem:[#allocation1] sm:$0xff]
          %444 = vst [vmem:[#allocation1] ss:$9 sm:$0xff] %v371
          %445 = vst [vmem:[%s420] ss:$9 sm:$0xff] %v372
          %446 = vst [vmem:[%s422] ss:$9 sm:$0xff] %v373
          %447 = vst [vmem:[%s424] ss:$9 sm:$0xff] %v374
          %448 = vst [vmem:[%s426] ss:$9 sm:$0xff] %v375
          %449 = vst [vmem:[%s428] ss:$9 sm:$0xff] %v376
          %450 = vst [vmem:[%s430] ss:$9 sm:$0xff] %v377
          %451 = vst [vmem:[%s432] ss:$9 sm:$0xff] %v378
          %v452 = vld [vmem:[#allocation1] sm:$0xff]
          %453 = vst [vmem:[#allocation1] ss:$9 sm:$0xff] %v379
          %454 = vst [vmem:[%s420] ss:$9 sm:$0xff] %v380
          %455 = vst [vmem:[%s422] ss:$9 sm:$0xff] %v381
          %456 = vst [vmem:[%s424] ss:$9 sm:$0xff] %v382
          %457 = vst [vmem:[%s426] ss:$9 sm:$0xff] %v383
          %458 = vst [vmem:[%s428] ss:$9 sm:$0xff] %v384
          %459 = vst [vmem:[%s430] ss:$9 sm:$0xff] %v385
          %460 = vst [vmem:[%s432] ss:$9 sm:$0xff] %v386
          %v461 = vld [vmem:[#allocation1] sm:$0xff]
          %462 = vst [vmem:[#allocation1] ss:$9 sm:$0xff] %v387
          %463 = vst [vmem:[%s420] ss:$9 sm:$0xff] %v388
          %464 = vst [vmem:[%s422] ss:$9 sm:$0xff] %v389
          %465 = vst [vmem:[%s424] ss:$9 sm:$0xff] %v390
          %466 = vst [vmem:[%s426] ss:$9 sm:$0xff] %v391
          %467 = vst [vmem:[%s428] ss:$9 sm:$0xff] %v392
          %468 = vst [vmem:[%s430] ss:$9 sm:$0xff] %v393
          %469 = vst [vmem:[%s432] ss:$9 sm:$0xff] %v394
          %v470 = vld [vmem:[#allocation1] sm:$0xff]
          %471 = vst [vmem:[#allocation1] ss:$9 sm:$0xff] %v395
          %472 = vst [vmem:[%s420] ss:$9 sm:$0xff] %v396
          %473 = vst [vmem:[%s422] ss:$9 sm:$0xff] %v397
          %474 = vst [vmem:[%s424] ss:$9 sm:$0xff] %v398
          %475 = vst [vmem:[%s426] ss:$9 sm:$0xff] %v399
          %476 = vst [vmem:[%s428] ss:$9 sm:$0xff] %v400
          %477 = vst [vmem:[%s430] ss:$9 sm:$0xff] %v401
          %478 = vst [vmem:[%s432] ss:$9 sm:$0xff] %v402
          %v479 = vld [vmem:[#allocation1] sm:$0xff]
          %480 = vst [vmem:[#allocation1] ss:$9 sm:$0xff] %v403
          %481 = vst [vmem:[%s420] ss:$9 sm:$0xff] %v404
          %482 = vst [vmem:[%s422] ss:$9 sm:$0xff] %v405
          %483 = vst [vmem:[%s424] ss:$9 sm:$0xff] %v406
          %484 = vst [vmem:[%s426] ss:$9 sm:$0xff] %v407
          %485 = vst [vmem:[%s428] ss:$9 sm:$0xff] %v408
          %486 = vst [vmem:[%s430] ss:$9 sm:$0xff] %v409
          %487 = vst [vmem:[%s432] ss:$9 sm:$0xff] %v410
          %v488 = vld [vmem:[#allocation1] sm:$0xff]
          %489 = vst [vmem:[#allocation1] ss:$9 sm:$0xff] %v411
          %490 = vst [vmem:[%s420] ss:$9 sm:$0xff] %v412
          %491 = vst [vmem:[%s422] ss:$9 sm:$0xff] %v413
          %492 = vst [vmem:[%s424] ss:$9 sm:$0xff] %v414
          %493 = vst [vmem:[%s426] ss:$9 sm:$0xff] %v415
          %494 = vst [vmem:[%s428] ss:$9 sm:$0xff] %v416
          %495 = vst [vmem:[%s430] ss:$9 sm:$0xff] %v417
          %496 = vst [vmem:[%s432] ss:$9 sm:$0xff] %v418
          %v497 = vld [vmem:[#allocation1] sm:$0xff]
          %498 = vset.pattern.permute.xlu0 0
          %499 = vperm.xlu0 %498, %v434
          %v500 = vpop.permute.xlu0 %499
          %501 = vset.pattern.permute.xlu0 0
          %502 = vperm.xlu0 %501, %v443
          %v503 = vpop.permute.xlu0 %502
          %504 = vset.pattern.permute.xlu0 0
          %505 = vperm.xlu0 %504, %v452
          %v506 = vpop.permute.xlu0 %505
          %507 = vset.pattern.permute.xlu0 0
          %508 = vperm.xlu0 %507, %v461
          %v509 = vpop.permute.xlu0 %508
          %510 = vset.pattern.permute.xlu0 0
          %511 = vperm.xlu0 %510, %v470
          %v512 = vpop.permute.xlu0 %511
          %513 = vset.pattern.permute.xlu0 0
          %514 = vperm.xlu0 %513, %v479
          %v515 = vpop.permute.xlu0 %514
          %516 = vset.pattern.permute.xlu0 0
          %517 = vperm.xlu0 %516, %v488
          %v518 = vpop.permute.xlu0 %517
          %519 = vset.pattern.permute.xlu0 0
          %520 = vperm.xlu0 %519, %v497
          %v521 = vpop.permute.xlu0 %520
          %v522 = vlaneseq
          %v523 = vand.u32 %v522, 127
          %v524 = vperm.slane %v500, %v523
          %v525 = vadd.s32 %v523, 4294967288
          %v526 = vperm.slane %v503, %v525
          %vm527 = vcmask 130112
          %v528 = vsel %vm527, %v526, %v524
          %v529 = vadd.s32 %v523, 4294967280
          %v530 = vperm.slane %v506, %v529
          %vm531 = vcmask 195712
          %v532 = vsel %vm531, %v530, %v528
          %v533 = vadd.s32 %v523, 4294967272
          %v534 = vperm.slane %v509, %v533
          %vm535 = vcmask 261312
          %v536 = vsel %vm535, %v534, %v532
          %v537 = vadd.s32 %v523, 4294967264
          %v538 = vperm.slane %v512, %v537
          %vm539 = vcmask 326912
          %v540 = vsel %vm539, %v538, %v536
          %v541 = vadd.s32 %v523, 4294967256
          %v542 = vperm.slane %v515, %v541
          %vm543 = vcmask 392512
          %v544 = vsel %vm543, %v542, %v540
          %v545 = vadd.s32 %v523, 4294967248
          %v546 = vperm.slane %v518, %v545
          %vm547 = vcmask 458112
          %v548 = vsel %vm547, %v546, %v544
          %v549 = vadd.s32 %v523, 4294967240
          %v550 = vperm.slane %v521, %v549
          %vm551 = vcmask 523712
          %v552 = vsel %vm551, %v550, %v548
          %v554 = vadd.f32 %v346, %v552
          %vm555 = vcmask 516096
          %556 = vst.msk [vmem:[#allocation2] sm:$0x1] %vm555, %v554
          %v557 = vld [vmem:[#allocation3] sm:$0x1]
          %v566 = vperm.slane %v249, 0
          %v567 = vperm.slane %v249, 1
          %v568 = vperm.slane %v249, 2
          %v569 = vperm.slane %v249, 3
          %v570 = vperm.slane %v249, 4
          %v571 = vperm.slane %v249, 5
          %v572 = vperm.slane %v249, 6
          %v573 = vperm.slane %v249, 7
          %v574 = vperm.slane %v252, 0
          %v575 = vperm.slane %v252, 1
          %v576 = vperm.slane %v252, 2
          %v577 = vperm.slane %v252, 3
          %v578 = vperm.slane %v252, 4
          %v579 = vperm.slane %v252, 5
          %v580 = vperm.slane %v252, 6
          %v581 = vperm.slane %v252, 7
          %v582 = vperm.slane %v255, 0
          %v583 = vperm.slane %v255, 1
          %v584 = vperm.slane %v255, 2
          %v585 = vperm.slane %v255, 3
          %v586 = vperm.slane %v255, 4
          %v587 = vperm.slane %v255, 5
          %v588 = vperm.slane %v255, 6
          %v589 = vperm.slane %v255, 7
          %v590 = vperm.slane %v258, 0
          %v591 = vperm.slane %v258, 1
          %v592 = vperm.slane %v258, 2
          %v593 = vperm.slane %v258, 3
          %v594 = vperm.slane %v258, 4
          %v595 = vperm.slane %v258, 5
          %v596 = vperm.slane %v258, 6
          %v597 = vperm.slane %v258, 7
          %v598 = vperm.slane %v261, 0
          %v599 = vperm.slane %v261, 1
          %v600 = vperm.slane %v261, 2
          %v601 = vperm.slane %v261, 3
          %v602 = vperm.slane %v261, 4
          %v603 = vperm.slane %v261, 5
          %v604 = vperm.slane %v261, 6
          %v605 = vperm.slane %v261, 7
          %v606 = vperm.slane %v264, 0
          %v607 = vperm.slane %v264, 1
          %v608 = vperm.slane %v264, 2
          %v609 = vperm.slane %v264, 3
          %v610 = vperm.slane %v264, 4
          %v611 = vperm.slane %v264, 5
          %v612 = vperm.slane %v264, 6
          %v613 = vperm.slane %v264, 7
          %v614 = vperm.slane %v267, 0
          %v615 = vperm.slane %v267, 1
          %v616 = vperm.slane %v267, 2
          %v617 = vperm.slane %v267, 3
          %v618 = vperm.slane %v267, 4
          %v619 = vperm.slane %v267, 5
          %v620 = vperm.slane %v267, 6
          %v621 = vperm.slane %v267, 7
          %v622 = vperm.slane %v270, 0
          %v623 = vperm.slane %v270, 1
          %v624 = vperm.slane %v270, 2
          %v625 = vperm.slane %v270, 3
          %v626 = vperm.slane %v270, 4
          %v627 = vperm.slane %v270, 5
          %v628 = vperm.slane %v270, 6
          %v629 = vperm.slane %v270, 7
          %630 = vst [vmem:[#allocation1] ss:$9 sm:$0xff] %v566
          %s631 = scalar_lea.vmem [#allocation1], 1
          %632 = vst [vmem:[%s631] ss:$9 sm:$0xff] %v567
          %s633 = scalar_lea.vmem [#allocation1], 2
          %634 = vst [vmem:[%s633] ss:$9 sm:$0xff] %v568
          %s635 = scalar_lea.vmem [#allocation1], 3
          %636 = vst [vmem:[%s635] ss:$9 sm:$0xff] %v569
          %s637 = scalar_lea.vmem [#allocation1], 4
          %638 = vst [vmem:[%s637] ss:$9 sm:$0xff] %v570
          %s639 = scalar_lea.vmem [#allocation1], 5
          %640 = vst [vmem:[%s639] ss:$9 sm:$0xff] %v571
          %s641 = scalar_lea.vmem [#allocation1], 6
          %642 = vst [vmem:[%s641] ss:$9 sm:$0xff] %v572
          %s643 = scalar_lea.vmem [#allocation1], 7
          %644 = vst [vmem:[%s643] ss:$9 sm:$0xff] %v573
          %v645 = vld [vmem:[#allocation1] sm:$0xff]
          %646 = vst [vmem:[#allocation1] ss:$9 sm:$0xff] %v574
          %647 = vst [vmem:[%s631] ss:$9 sm:$0xff] %v575
          %648 = vst [vmem:[%s633] ss:$9 sm:$0xff] %v576
          %649 = vst [vmem:[%s635] ss:$9 sm:$0xff] %v577
          %650 = vst [vmem:[%s637] ss:$9 sm:$0xff] %v578
          %651 = vst [vmem:[%s639] ss:$9 sm:$0xff] %v579
          %652 = vst [vmem:[%s641] ss:$9 sm:$0xff] %v580
          %653 = vst [vmem:[%s643] ss:$9 sm:$0xff] %v581
          %v654 = vld [vmem:[#allocation1] sm:$0xff]
          %655 = vst [vmem:[#allocation1] ss:$9 sm:$0xff] %v582
          %656 = vst [vmem:[%s631] ss:$9 sm:$0xff] %v583
          %657 = vst [vmem:[%s633] ss:$9 sm:$0xff] %v584
          %658 = vst [vmem:[%s635] ss:$9 sm:$0xff] %v585
          %659 = vst [vmem:[%s637] ss:$9 sm:$0xff] %v586
          %660 = vst [vmem:[%s639] ss:$9 sm:$0xff] %v587
          %661 = vst [vmem:[%s641] ss:$9 sm:$0xff] %v588
          %662 = vst [vmem:[%s643] ss:$9 sm:$0xff] %v589
          %v663 = vld [vmem:[#allocation1] sm:$0xff]
          %664 = vst [vmem:[#allocation1] ss:$9 sm:$0xff] %v590
          %665 = vst [vmem:[%s631] ss:$9 sm:$0xff] %v591
          %666 = vst [vmem:[%s633] ss:$9 sm:$0xff] %v592
          %667 = vst [vmem:[%s635] ss:$9 sm:$0xff] %v593
          %668 = vst [vmem:[%s637] ss:$9 sm:$0xff] %v594
          %669 = vst [vmem:[%s639] ss:$9 sm:$0xff] %v595
          %670 = vst [vmem:[%s641] ss:$9 sm:$0xff] %v596
          %671 = vst [vmem:[%s643] ss:$9 sm:$0xff] %v597
          %v672 = vld [vmem:[#allocation1] sm:$0xff]
          %673 = vst [vmem:[#allocation1] ss:$9 sm:$0xff] %v598
          %674 = vst [vmem:[%s631] ss:$9 sm:$0xff] %v599
          %675 = vst [vmem:[%s633] ss:$9 sm:$0xff] %v600
          %676 = vst [vmem:[%s635] ss:$9 sm:$0xff] %v601
          %677 = vst [vmem:[%s637] ss:$9 sm:$0xff] %v602
          %678 = vst [vmem:[%s639] ss:$9 sm:$0xff] %v603
          %679 = vst [vmem:[%s641] ss:$9 sm:$0xff] %v604
          %680 = vst [vmem:[%s643] ss:$9 sm:$0xff] %v605
          %v681 = vld [vmem:[#allocation1] sm:$0xff]
          %682 = vst [vmem:[#allocation1] ss:$9 sm:$0xff] %v606
          %683 = vst [vmem:[%s631] ss:$9 sm:$0xff] %v607
          %684 = vst [vmem:[%s633] ss:$9 sm:$0xff] %v608
          %685 = vst [vmem:[%s635] ss:$9 sm:$0xff] %v609
          %686 = vst [vmem:[%s637] ss:$9 sm:$0xff] %v610
          %687 = vst [vmem:[%s639] ss:$9 sm:$0xff] %v611
          %688 = vst [vmem:[%s641] ss:$9 sm:$0xff] %v612
          %689 = vst [vmem:[%s643] ss:$9 sm:$0xff] %v613
          %v690 = vld [vmem:[#allocation1] sm:$0xff]
          %691 = vst [vmem:[#allocation1] ss:$9 sm:$0xff] %v614
          %692 = vst [vmem:[%s631] ss:$9 sm:$0xff] %v615
          %693 = vst [vmem:[%s633] ss:$9 sm:$0xff] %v616
          %694 = vst [vmem:[%s635] ss:$9 sm:$0xff] %v617
          %695 = vst [vmem:[%s637] ss:$9 sm:$0xff] %v618
          %696 = vst [vmem:[%s639] ss:$9 sm:$0xff] %v619
          %697 = vst [vmem:[%s641] ss:$9 sm:$0xff] %v620
          %698 = vst [vmem:[%s643] ss:$9 sm:$0xff] %v621
          %v699 = vld [vmem:[#allocation1] sm:$0xff]
          %700 = vst [vmem:[#allocation1] ss:$9 sm:$0xff] %v622
          %701 = vst [vmem:[%s631] ss:$9 sm:$0xff] %v623
          %702 = vst [vmem:[%s633] ss:$9 sm:$0xff] %v624
          %703 = vst [vmem:[%s635] ss:$9 sm:$0xff] %v625
          %704 = vst [vmem:[%s637] ss:$9 sm:$0xff] %v626
          %705 = vst [vmem:[%s639] ss:$9 sm:$0xff] %v627
          %706 = vst [vmem:[%s641] ss:$9 sm:$0xff] %v628
          %707 = vst [vmem:[%s643] ss:$9 sm:$0xff] %v629
          %v708 = vld [vmem:[#allocation1] sm:$0xff]
          %709 = vset.pattern.permute.xlu0 0
          %710 = vperm.xlu0 %709, %v645
          %v711 = vpop.permute.xlu0 %710
          %712 = vset.pattern.permute.xlu0 0
          %713 = vperm.xlu0 %712, %v654
          %v714 = vpop.permute.xlu0 %713
          %715 = vset.pattern.permute.xlu0 0
          %716 = vperm.xlu0 %715, %v663
          %v717 = vpop.permute.xlu0 %716
          %718 = vset.pattern.permute.xlu0 0
          %719 = vperm.xlu0 %718, %v672
          %v720 = vpop.permute.xlu0 %719
          %721 = vset.pattern.permute.xlu0 0
          %722 = vperm.xlu0 %721, %v681
          %v723 = vpop.permute.xlu0 %722
          %724 = vset.pattern.permute.xlu0 0
          %725 = vperm.xlu0 %724, %v690
          %v726 = vpop.permute.xlu0 %725
          %727 = vset.pattern.permute.xlu0 0
          %728 = vperm.xlu0 %727, %v699
          %v729 = vpop.permute.xlu0 %728
          %730 = vset.pattern.permute.xlu0 0
          %731 = vperm.xlu0 %730, %v708
          %v732 = vpop.permute.xlu0 %731
          %v733 = vperm.slane %v711, %v523
          %v734 = vperm.slane %v714, %v525
          %v735 = vsel %vm527, %v734, %v733
          %v736 = vperm.slane %v717, %v529
          %v737 = vsel %vm531, %v736, %v735
          %v738 = vperm.slane %v720, %v533
          %v739 = vsel %vm535, %v738, %v737
          %v740 = vperm.slane %v723, %v537
          %v741 = vsel %vm539, %v740, %v739
          %v742 = vperm.slane %v726, %v541
          %v743 = vsel %vm543, %v742, %v741
          %v744 = vperm.slane %v729, %v545
          %v745 = vsel %vm547, %v744, %v743
          %v746 = vperm.slane %v732, %v549
          %v747 = vsel %vm551, %v746, %v745
          %v749 = vmax.f32 %v557, %v747
          %750 = vst.msk [vmem:[#allocation3] sm:$0x1] %vm555, %v749
        $region44: #{tpu_custom_call.1} parent=31 // pred_fallthru
          _
        // Predicated region
        $region45: #{tpu_custom_call.1} parent=31 // pred_check
          %p751 = pneg %p271
        $region46: #{tpu_custom_call.1} parent=31 // pred_check_branch
          %753 = sbr.rel (%p751) target = $region48
        $region47: #{tpu_custom_call.1} parent=31 // pred_region
          %v754 = vld [vmem:[#allocation2] sm:$0x1]
          %v755 = vmul.f32 %v754, 0.00390625
          %v756 = vld [vmem:[#allocation3] sm:$0x1]
          %v758 = vperm.slane %v756, 0
          %vm760 = vcmask 1040384
          %v761 = vsel %vm760, %v755, %v758
          %v762 = vld [vmem:[%s1] sm:$0xff]
          %v763 = vld [vmem:[%s1 + $0x8] sm:$0xff]
          %v764 = vld [vmem:[%s1 + $0x10] sm:$0xff]
          %v765 = vld [vmem:[%s1 + $0x18] sm:$0xff]
          %v766 = vld [vmem:[%s1 + $0x20] sm:$0xff]
          %v767 = vld [vmem:[%s1 + $0x28] sm:$0xff]
          %v768 = vld [vmem:[%s1 + $0x30] sm:$0xff]
          %v769 = vld [vmem:[%s1 + $0x38] sm:$0xff]
          %vm770 = vcmask 523264
          %v772 = vsel %vm770, %v761, 0
          %774 = vmatpush.msra.mxu0 0.0
          %775 = vmatpush.msra.mxu0 0.0
          %776 = vmatpush.msra.mxu0 0.0
          %777 = vmatpush.msra.mxu0 0.0
          %778 = vmatpush.msra.mxu0 0.0
          %779 = vmatpush.msra.mxu0 0.0
          %780 = vmatpush.msra.mxu0 0.0
          %781 = vmatpush.msra.mxu0 0.0
          %782 = vmatpush.msra.mxu0 %v769
          %783 = vmatpush.msra.mxu0 %v768
          %784 = vmatpush.msra.mxu0 %v767
          %785 = vmatpush.msra.mxu0 %v766
          %786 = vmatpush.msra.mxu0 %v765
          %787 = vmatpush.msra.mxu0 %v764
          %788 = vmatpush.msra.mxu0 %v763
          %789 = vmatpush.msra.mxu0 %v762
          %790 = vmatmul.f32.gmra.mxu0 %v772
          %v791 = vpop.f32.mrf.mxu0
          %v792 = vadd.f32 0.0, %v791
          %793 = vdwg.mxu0
          %v794 = vmax.f32 %v792, 0.0
          %v795 = vld [vmem:[%s2] sm:$0xf]
          %vm796 = vcmask 31744
          %v798 = vsel %vm796, %v794, 0
          %vm800 = vcmask 1043456
          %v802 = vsel %vm800, %v795, 0
          %804 = vmatpush.msra.mxu0 0.0
          %805 = vmatpush.msra.mxu0 0.0
          %806 = vmatpush.msra.mxu0 0.0
          %807 = vmatpush.msra.mxu0 0.0
          %808 = vmatpush.msra.mxu0 0.0
          %809 = vmatpush.msra.mxu0 0.0
          %810 = vmatpush.msra.mxu0 0.0
          %811 = vmatpush.msra.mxu0 0.0
          %812 = vmatpush.msra.mxu0 0.0
          %813 = vmatpush.msra.mxu0 0.0
          %814 = vmatpush.msra.mxu0 0.0
          %815 = vmatpush.msra.mxu0 0.0
          %816 = vmatpush.msra.mxu0 0.0
          %817 = vmatpush.msra.mxu0 0.0
          %818 = vmatpush.msra.mxu0 0.0
          %819 = vmatpush.msra.mxu0 %v802
          %820 = vmatmul.f32.gmra.mxu0 %v798
          %v821 = vpop.f32.mrf.mxu0
          %v822 = vadd.f32 0.0, %v821
          %823 = vdwg.mxu0
          %v825 = vrot.slane %v822, 1
          %v827 = vadd.f32 %v822, %v825
          %v828 = vxor.u32 %v827, 2147483648
          %v829 = vmul.f32 %v828, 1.442695
          %v830 = vpow.pop %v829
          %v831 = vadd.f32 %v830, 1.0
          %v832 = vrcp.pop %v831
          %v833 = vmul.f32 %v831, %v832
          %v834 = vsub.f32 1.0, %v833
          %v835 = vmul.f32 %v832, %v834
          %v836 = vadd.f32 %v832, %v835
          %vm837 = vweird.f32 %v831
          %vm838 = vweird.f32 %v832
          %vm839 = vmor %vm837, %vm838
          %v840 = vsel %vm839, %v832, %v836
          %v841 = vand.u32 2147483647, %v831
          %vm842 = vcmp.eq.f32.partialorder %v841, 8.507059e+37
          %v843 = vand.u32 %v831, 2147483648
          %v844 = vor.u32 1.1754944e-38, %v843
          %v845 = vsel %vm842, %v844, %v840
          %v846 = vmul.f32 1.0, %v845
          %vm847 = vcmask 516096
          %848 = vst.msk [vmem:[%s205] sm:$0x1] %vm847, %v846
        $region48: #{tpu_custom_call.1} parent=31 // pred_fallthru
          _
        %s849 = sand.u32 %s110, 1
        %s850 = scalar_lea.sflag [#allocation6], %s849
        %s851 = sand.u32 %s110, 1
        %s852 = scalar_lea.vmem [#allocation7], %s851
        // Predicated region
        $region49: #{tpu_custom_call.1} parent=31 // pred_check
          %p853 = pneg %p120
        $region50: #{tpu_custom_call.1} parent=31 // pred_check_branch
          %855 = sbr.rel (%p853) target = $region52
        $region51: #{tpu_custom_call.1} parent=31 // pred_region
          %857 = vsyncadd %s850, 0
          %s858 = scalar_lea.hbm %s3, %s24
          %s860 = sshll.u32 %s852, 4
          %s861 = int_to_ptr.vmem [resolvable:$true] %s860
          %s862 = sshll.u32 %s858, 4
          %s863 = int_to_ptr.hbm [resolvable:$true] %s862
          %865 = dma.vmem_to_hbm [thread:$0]  %s861, 16, %s863, %s850
        $region52: #{tpu_custom_call.1} parent=31 // pred_fallthru
          _
      $region32: #{tpu_custom_call.1} parent=5 // pred_fallthru
        _
      %p866 = scmp.le.s32.totalorder 2, %s15
      // Predicated region
      $region53: #{tpu_custom_call.1} parent=5 // pred_check
        %p867 = pneg %p866
      $region54: #{tpu_custom_call.1} parent=5 // pred_check_branch
        %869 = sbr.rel (%p867) target = $region56
      $region55: #{tpu_custom_call.1} parent=5 // pred_region
        %s870 = ssub.s32 %s15, 2
        // Predicated region
        $region57: #{tpu_custom_call.1} parent=55 // pred_check
          %p871 = pneg %p126
        $region58: #{tpu_custom_call.1} parent=55 // pred_check_branch
          %873 = sbr.rel (%p871) target = $region60
        $region59: #{tpu_custom_call.1} parent=55 // pred_region
          %s874 = sand.u32 %s111, 1
          %s875 = scalar_lea.sflag [#allocation6], %s874
          %s876 = sand.u32 %s111, 1
          %s877 = scalar_lea.vmem [#allocation7], %s876
          %879 = dma.done %s875, 16
        $region60: #{tpu_custom_call.1} parent=55 // pred_fallthru
          _
      $region56: #{tpu_custom_call.1} parent=5 // pred_fallthru
        _
    $region6: #{tpu_custom_call.1} parent=1 // loop_footer
      %s19 = sadd.s32 1, %s15
    $region7: #{tpu_custom_call.1} parent=1 // loop_footer_branch
      %14 = sbr.rel target = $region3
    $region8: #{tpu_custom_call.1} parent=1 // loop_exit
      _
    %880 = vsyncpa [#allocation5], 1
    %s881 = scalar_lea.sflag [#allocation5], 1
    %882 = vsyncpa %s881, 1
    %883 = vsyncpa [#allocation6], 1
    %s884 = scalar_lea.sflag [#allocation6], 1
    %885 = vsyncpa %s884, 1

</llo_original>
